<compile_context>
chip_gen: v6e
topology: v6e:2x2x1
jax: 0.10.0
libtpu: 0.0.40
codegen_flags: <defaults>
</compile_context>

<pallas_src>
import functools

import jax
import jax.numpy as jnp
import numpy as np
from jax.experimental import pallas as pl
from jax.experimental.pallas import tpu as pltpu


# ----------------------------- Pallas kernel -------------------------------

def _layernorm(x, gamma, beta, eps=1e-5):
    # PyTorch nn.LayerNorm: biased variance over last dim, then affine.
    # Stats in f32; rsqrt goes to the EUP (separate VLIW slot, ~free).
    mean = jnp.mean(x, axis=-1, keepdims=True)
    var = jnp.mean((x - mean) ** 2, axis=-1, keepdims=True)
    inv = jax.lax.rsqrt(var + eps)
    return (x - mean) * inv * gamma + beta


def block_classifier_kernel(
    x_ref,
    w0_ref, b0_ref,                                   # initial_fc
    r1w1_ref, r1b1_ref, r1g1_ref, r1be1_ref,          # resblock1 fc1 / norm1
    r1w2_ref, r1b2_ref, r1g2_ref, r1be2_ref,          # resblock1 fc2 / norm2
    r2w1_ref, r2b1_ref, r2g1_ref, r2be1_ref,          # resblock2 fc1 / norm1
    r2w2_ref, r2b2_ref, r2g2_ref, r2be2_ref,          # resblock2 fc2 / norm2
    wf_ref, bf_ref,                                   # final_fc (lane-padded to 128)
    out_ref,
):
    # Matmul inputs in bf16, accumulation in f32, elementwise path in f32.
    x = x_ref[...].astype(jnp.bfloat16)

    # initial_fc + ReLU
    h = jnp.dot(x, w0_ref[...], preferred_element_type=jnp.float32) + b0_ref[...]
    h = jnp.maximum(h, 0.0)

    def resblock(h_f32, w1, b1, g1, be1, w2, b2, g2, be2):
        residual = h_f32
        out = jnp.dot(h_f32.astype(jnp.bfloat16), w1[...],
                      preferred_element_type=jnp.float32) + b1[...]
        out = jnp.maximum(_layernorm(out, g1[...], be1[...]), 0.0)
        out = jnp.dot(out.astype(jnp.bfloat16), w2[...],
                      preferred_element_type=jnp.float32) + b2[...]
        out = _layernorm(out, g2[...], be2[...]) + residual
        return jnp.maximum(out, 0.0)

    h = resblock(h, r1w1_ref, r1b1_ref, r1g1_ref, r1be1_ref,
                 r1w2_ref, r1b2_ref, r1g2_ref, r1be2_ref)
    h = resblock(h, r2w1_ref, r2b1_ref, r2g1_ref, r2be1_ref,
                 r2w2_ref, r2b2_ref, r2g2_ref, r2be2_ref)

    # dropout(p=0.2): eval-mode identity (inference semantics).
    # TODO(synk): training-mode dropout would use pltpu.prng_seed/prng_random_bits.

    out = jnp.dot(h.astype(jnp.bfloat16), wf_ref[...],
                  preferred_element_type=jnp.float32) + bf_ref[...]
    out_ref[...] = out.astype(out_ref.dtype)


# ------------------------------- wrapper ------------------------------------

def _round_up(n, m):
    return (n + m - 1) // m * m


def block_classifier_forward(x, params, *, block_rows=512):
    """x: (B, 15) float32 -> (B, 5) float32."""
    B = x.shape[0]
    NUM_CLASSES = 5
    PAD_OUT = 128  # lane-dense output width

    # --- batch tiling: pick a tile and zero-pad the batch to a multiple of it.
    TB = min(block_rows, _round_up(B, 8))
    Bp = _round_up(B, TB)
    if Bp != B:
        x = jnp.pad(x, ((0, Bp - B), (0, 0)))
    grid = (Bp // TB,)

    # --- param prep: pad the final projection to 128 output lanes.
    (w0, b0,
     r1w1, r1b1, r1g1, r1be1, r1w2, r1b2, r1g2, r1be2,
     r2w1, r2b1, r2g1, r2be1, r2w2, r2b2, r2g2, r2be2,
     wf, bf) = params
    wf_p = jnp.pad(wf, ((0, 0), (0, PAD_OUT - NUM_CLASSES)))
    bf_p = jnp.pad(bf, ((0, 0), (0, PAD_OUT - NUM_CLASSES)))
    kernel_params = (
        w0, b0,
        r1w1, r1b1, r1g1, r1be1, r1w2, r1b2, r1g2, r1be2,
        r2w1, r2b1, r2g1, r2be1, r2w2, r2b2, r2g2, r2be2,
        wf_p, bf_p,
    )

    # --- BlockSpecs: activations tiled over batch, params resident (constant map).
    x_spec = pl.BlockSpec((TB, x.shape[1]), lambda i: (i, 0))
    param_specs = [pl.BlockSpec(p.shape, lambda i: (0, 0)) for p in kernel_params]
    out_spec = pl.BlockSpec((TB, PAD_OUT), lambda i: (i, 0))

    out_padded = pl.pallas_call(
        block_classifier_kernel,
        grid=grid,
        out_shape=jax.ShapeDtypeStruct((Bp, PAD_OUT), jnp.float32),
        in_specs=[x_spec] + param_specs,
        out_specs=out_spec,
        compiler_params=pltpu.CompilerParams(
            dimension_semantics=("parallel",),
        ),
    )(x, *kernel_params)

    return out_padded[:B, :NUM_CLASSES]


# --------------------------- deterministic params ---------------------------

def make_params(key):
    """Weights stored as (in, out) in bf16; biases / LN params as (1, N) f32."""
    ks = iter(jax.random.split(key, 32))

    def lin(in_f, out_f):
        w = (jax.random.normal(next(ks), (in_f, out_f), jnp.float32) * 0.05
             ).astype(jnp.bfloat16)
        b = jax.random.normal(next(ks), (1, out_f), jnp.float32) * 0.05
        return w, b

    def ln(n):
        g = 1.0 + 0.01 * jax.random.normal(next(ks), (1, n), jnp.float32)
        be = 0.01 * jax.random.normal(next(ks), (1, n), jnp.float32)
        return g, be

    w0, b0 = lin(15, 64)

    def resblock_params():
        w1, b1 = lin(64, 128)
        g1, be1 = ln(128)
        w2, b2 = lin(128, 64)
        g2, be2 = ln(64)
        return (w1, b1, g1, be1, w2, b2, g2, be2)

    rb1 = resblock_params()
    rb2 = resblock_params()
    wf, bf = lin(64, 5)

    return (w0, b0) + rb1 + rb2 + (wf, bf)


# ----------------------------- pure-JAX reference ---------------------------

def reference_forward(x, params):
    # f32 reference using the same (bf16-stored) weights cast up to f32.
    (w0, b0,
     r1w1, r1b1, r1g1, r1be1, r1w2, r1b2, r1g2, r1be2,
     r2w1, r2b1, r2g1, r2be1, r2w2, r2b2, r2g2, r2be2,
     wf, bf) = [p.astype(jnp.float32) for p in params]

    def ln(v, g, b, eps=1e-5):
        m = jnp.mean(v, axis=-1, keepdims=True)
        var = jnp.mean((v - m) ** 2, axis=-1, keepdims=True)
        return (v - m) / jnp.sqrt(var + eps) * g + b

    def resblock(h, w1, b1, g1, be1, w2, b2, g2, be2):
        r = h
        o = jnp.maximum(ln(h @ w1 + b1, g1, be1), 0.0)
        o = ln(o @ w2 + b2, g2, be2) + r
        return jnp.maximum(o, 0.0)

    h = jnp.maximum(x @ w0 + b0, 0.0)
    h = resblock(h, r1w1, r1b1, r1g1, r1be1, r1w2, r1b2, r1g2, r1be2)
    h = resblock(h, r2w1, r2b1, r2g1, r2be1, r2w2, r2b2, r2g2, r2be2)
    return h @ wf + bf


# --------------------------------- main --------------------------------------

if __name__ == "__main__":
    key = jax.random.PRNGKey(0)
    k_x, k_p, k_x2 = jax.random.split(key, 3)

    params = make_params(k_p)

    # Small test (B=8): single grid step.
    B = 8
    x = jax.random.normal(k_x, (B, 15), jnp.float32)
    out = jax.block_until_ready(block_classifier_forward(x, params))
    ref = jax.block_until_ready(reference_forward(x, params))
    np.testing.assert_allclose(np.asarray(out), np.asarray(ref),
                               rtol=2e-2, atol=2e-2)

    # Slightly larger test: exercises multi-step grid + batch-tail padding
    # (B=200 with 128-row tiles -> padded to 256, grid=(2,)).
    B2 = 200
    x2 = jax.random.normal(k_x2, (B2, 15), jnp.float32)
    out2 = jax.block_until_ready(
        block_classifier_forward(x2, params, block_rows=128))
    ref2 = jax.block_until_ready(reference_forward(x2, params))
    np.testing.assert_allclose(np.asarray(out2), np.asarray(ref2),
                               rtol=2e-2, atol=2e-2)

    print("KERNEL_OK")
</pallas_src>

<mosaic_0001>
module attributes {stable_mosaic.version = 11 : i64} {
  func.func @block_classifier_kernel(%arg0: i32, %arg1: memref<8x15xf32, #tpu.memory_space<vmem>>, %arg2: memref<15x64xbf16, #tpu.memory_space<vmem>>, %arg3: memref<1x64xf32, #tpu.memory_space<vmem>>, %arg4: memref<64x128xbf16, #tpu.memory_space<vmem>>, %arg5: memref<1x128xf32, #tpu.memory_space<vmem>>, %arg6: memref<1x128xf32, #tpu.memory_space<vmem>>, %arg7: memref<1x128xf32, #tpu.memory_space<vmem>>, %arg8: memref<128x64xbf16, #tpu.memory_space<vmem>>, %arg9: memref<1x64xf32, #tpu.memory_space<vmem>>, %arg10: memref<1x64xf32, #tpu.memory_space<vmem>>, %arg11: memref<1x64xf32, #tpu.memory_space<vmem>>, %arg12: memref<64x128xbf16, #tpu.memory_space<vmem>>, %arg13: memref<1x128xf32, #tpu.memory_space<vmem>>, %arg14: memref<1x128xf32, #tpu.memory_space<vmem>>, %arg15: memref<1x128xf32, #tpu.memory_space<vmem>>, %arg16: memref<128x64xbf16, #tpu.memory_space<vmem>>, %arg17: memref<1x64xf32, #tpu.memory_space<vmem>>, %arg18: memref<1x64xf32, #tpu.memory_space<vmem>>, %arg19: memref<1x64xf32, #tpu.memory_space<vmem>>, %arg20: memref<64x128xbf16, #tpu.memory_space<vmem>>, %arg21: memref<1x128xf32, #tpu.memory_space<vmem>>, %arg22: memref<8x128xf32, #tpu.memory_space<vmem>>) attributes {dimension_semantics = [#tpu.dimension_semantics<parallel>], iteration_bounds = array<i64: 1>, scalar_prefetch = 0 : i64, scratch_operands = 0 : i64, tpu.core_type = #tpu.core_type<tc>, window_params = [{transform_indices = @transform_0, window_bounds = array<i64: 8, 15>}, {pipeline_mode = #tpu.pipeline_mode<synchronous>, transform_indices = @transform_1, window_bounds = array<i64: 15, 64>}, {pipeline_mode = #tpu.pipeline_mode<synchronous>, transform_indices = @transform_2, window_bounds = array<i64: 1, 64>}, {pipeline_mode = #tpu.pipeline_mode<synchronous>, transform_indices = @transform_3, window_bounds = array<i64: 64, 128>}, {pipeline_mode = #tpu.pipeline_mode<synchronous>, transform_indices = @transform_4, window_bounds = array<i64: 1, 128>}, {pipeline_mode = #tpu.pipeline_mode<synchronous>, transform_indices = @transform_5, window_bounds = array<i64: 1, 128>}, {pipeline_mode = #tpu.pipeline_mode<synchronous>, transform_indices = @transform_6, window_bounds = array<i64: 1, 128>}, {pipeline_mode = #tpu.pipeline_mode<synchronous>, transform_indices = @transform_7, window_bounds = array<i64: 128, 64>}, {pipeline_mode = #tpu.pipeline_mode<synchronous>, transform_indices = @transform_8, window_bounds = array<i64: 1, 64>}, {pipeline_mode = #tpu.pipeline_mode<synchronous>, transform_indices = @transform_9, window_bounds = array<i64: 1, 64>}, {pipeline_mode = #tpu.pipeline_mode<synchronous>, transform_indices = @transform_10, window_bounds = array<i64: 1, 64>}, {pipeline_mode = #tpu.pipeline_mode<synchronous>, transform_indices = @transform_11, window_bounds = array<i64: 64, 128>}, {pipeline_mode = #tpu.pipeline_mode<synchronous>, transform_indices = @transform_12, window_bounds = array<i64: 1, 128>}, {pipeline_mode = #tpu.pipeline_mode<synchronous>, transform_indices = @transform_13, window_bounds = array<i64: 1, 128>}, {pipeline_mode = #tpu.pipeline_mode<synchronous>, transform_indices = @transform_14, window_bounds = array<i64: 1, 128>}, {pipeline_mode = #tpu.pipeline_mode<synchronous>, transform_indices = @transform_15, window_bounds = array<i64: 128, 64>}, {pipeline_mode = #tpu.pipeline_mode<synchronous>, transform_indices = @transform_16, window_bounds = array<i64: 1, 64>}, {pipeline_mode = #tpu.pipeline_mode<synchronous>, transform_indices = @transform_17, window_bounds = array<i64: 1, 64>}, {pipeline_mode = #tpu.pipeline_mode<synchronous>, transform_indices = @transform_18, window_bounds = array<i64: 1, 64>}, {pipeline_mode = #tpu.pipeline_mode<synchronous>, transform_indices = @transform_19, window_bounds = array<i64: 64, 128>}, {pipeline_mode = #tpu.pipeline_mode<synchronous>, transform_indices = @transform_20, window_bounds = array<i64: 1, 128>}, {transform_indices = @transform_21, window_bounds = array<i64: 8, 128>}]} {
    %c0 = arith.constant 0 : index
    %c0_0 = arith.constant 0 : index
    %0 = vector.load %arg1[%c0, %c0_0] : memref<8x15xf32, #tpu.memory_space<vmem>>, vector<8x15xf32>
    %1 = arith.truncf %0 : vector<8x15xf32> to vector<8x15xbf16>
    %c0_1 = arith.constant 0 : index
    %c0_2 = arith.constant 0 : index
    %2 = vector.load %arg2[%c0_1, %c0_2] : memref<15x64xbf16, #tpu.memory_space<vmem>>, vector<15x64xbf16>
    %cst = arith.constant dense<0.000000e+00> : vector<8x64xf32>
    %3 = tpu.matmul %1, %2, %cst {dimension_numbers = #tpu.dot_dimension_numbers<[1], [0], [0], [1], [0, 0, 1, 1], [], []>} : vector<8x15xbf16>, vector<15x64xbf16>, vector<8x64xf32> -> vector<8x64xf32>
    %c0_3 = arith.constant 0 : index
    %c0_4 = arith.constant 0 : index
    %4 = vector.load %arg3[%c0_3, %c0_4] : memref<1x64xf32, #tpu.memory_space<vmem>>, vector<1x64xf32>
    %5 = vector.broadcast %4 : vector<1x64xf32> to vector<8x64xf32>
    %6 = arith.addf %3, %5 : vector<8x64xf32>
    %cst_5 = arith.constant 0.000000e+00 : f32
    %7 = vector.broadcast %cst_5 : f32 to vector<8x64xf32>
    %8 = arith.maximumf %6, %7 : vector<8x64xf32>
    %9 = arith.truncf %8 : vector<8x64xf32> to vector<8x64xbf16>
    %c0_6 = arith.constant 0 : index
    %c0_7 = arith.constant 0 : index
    %10 = vector.load %arg4[%c0_6, %c0_7] : memref<64x128xbf16, #tpu.memory_space<vmem>>, vector<64x128xbf16>
    %cst_8 = arith.constant dense<0.000000e+00> : vector<8x128xf32>
    %11 = tpu.matmul %9, %10, %cst_8 {dimension_numbers = #tpu.dot_dimension_numbers<[1], [0], [0], [1], [0, 0, 1, 1], [], []>} : vector<8x64xbf16>, vector<64x128xbf16>, vector<8x128xf32> -> vector<8x128xf32>
    %c0_9 = arith.constant 0 : index
    %c0_10 = arith.constant 0 : index
    %12 = vector.load %arg5[%c0_9, %c0_10] : memref<1x128xf32, #tpu.memory_space<vmem>>, vector<1x128xf32>
    %13 = vector.broadcast %12 : vector<1x128xf32> to vector<8x128xf32>
    %14 = arith.addf %11, %13 : vector<8x128xf32>
    %c0_11 = arith.constant 0 : index
    %c0_12 = arith.constant 0 : index
    %15 = vector.load %arg6[%c0_11, %c0_12] : memref<1x128xf32, #tpu.memory_space<vmem>>, vector<1x128xf32>
    %c0_13 = arith.constant 0 : index
    %c0_14 = arith.constant 0 : index
    %16 = vector.load %arg7[%c0_13, %c0_14] : memref<1x128xf32, #tpu.memory_space<vmem>>, vector<1x128xf32>
    %cst_15 = arith.constant dense<0.000000e+00> : vector<8xf32>
    %17 = vector.multi_reduction <add>, %14, %cst_15 [1] : vector<8x128xf32> to vector<8xf32>
    %18 = vector.shape_cast %17 : vector<8xf32> to vector<8x1xf32>
    %cst_16 = arith.constant 1.280000e+02 : f32
    %19 = vector.broadcast %cst_16 : f32 to vector<8x1xf32>
    %20 = arith.divf %18, %19 : vector<8x1xf32>
    %21 = vector.broadcast %20 : vector<8x1xf32> to vector<8x128xf32>
    %22 = arith.subf %14, %21 : vector<8x128xf32>
    %23 = arith.mulf %22, %22 : vector<8x128xf32>
    %cst_17 = arith.constant dense<0.000000e+00> : vector<8xf32>
    %24 = vector.multi_reduction <add>, %23, %cst_17 [1] : vector<8x128xf32> to vector<8xf32>
    %25 = vector.shape_cast %24 : vector<8xf32> to vector<8x1xf32>
    %cst_18 = arith.constant 1.280000e+02 : f32
    %26 = vector.broadcast %cst_18 : f32 to vector<8x1xf32>
    %27 = arith.divf %25, %26 : vector<8x1xf32>
    %cst_19 = arith.constant 9.99999974E-6 : f32
    %28 = vector.broadcast %cst_19 : f32 to vector<8x1xf32>
    %29 = arith.addf %27, %28 : vector<8x1xf32>
    %30 = math.rsqrt %29 : vector<8x1xf32>
    %31 = vector.broadcast %20 : vector<8x1xf32> to vector<8x128xf32>
    %32 = arith.subf %14, %31 : vector<8x128xf32>
    %33 = vector.broadcast %30 : vector<8x1xf32> to vector<8x128xf32>
    %34 = arith.mulf %32, %33 : vector<8x128xf32>
    %35 = vector.broadcast %15 : vector<1x128xf32> to vector<8x128xf32>
    %36 = arith.mulf %34, %35 : vector<8x128xf32>
    %37 = vector.broadcast %16 : vector<1x128xf32> to vector<8x128xf32>
    %38 = arith.addf %36, %37 : vector<8x128xf32>
    %cst_20 = arith.constant 0.000000e+00 : f32
    %39 = vector.broadcast %cst_20 : f32 to vector<8x128xf32>
    %40 = arith.maximumf %38, %39 : vector<8x128xf32>
    %41 = arith.truncf %40 : vector<8x128xf32> to vector<8x128xbf16>
    %c0_21 = arith.constant 0 : index
    %c0_22 = arith.constant 0 : index
    %42 = vector.load %arg8[%c0_21, %c0_22] : memref<128x64xbf16, #tpu.memory_space<vmem>>, vector<128x64xbf16>
    %cst_23 = arith.constant dense<0.000000e+00> : vector<8x64xf32>
    %43 = tpu.matmul %41, %42, %cst_23 {dimension_numbers = #tpu.dot_dimension_numbers<[1], [0], [0], [1], [0, 0, 1, 1], [], []>} : vector<8x128xbf16>, vector<128x64xbf16>, vector<8x64xf32> -> vector<8x64xf32>
    %c0_24 = arith.constant 0 : index
    %c0_25 = arith.constant 0 : index
    %44 = vector.load %arg9[%c0_24, %c0_25] : memref<1x64xf32, #tpu.memory_space<vmem>>, vector<1x64xf32>
    %45 = vector.broadcast %44 : vector<1x64xf32> to vector<8x64xf32>
    %46 = arith.addf %43, %45 : vector<8x64xf32>
    %c0_26 = arith.constant 0 : index
    %c0_27 = arith.constant 0 : index
    %47 = vector.load %arg10[%c0_26, %c0_27] : memref<1x64xf32, #tpu.memory_space<vmem>>, vector<1x64xf32>
    %c0_28 = arith.constant 0 : index
    %c0_29 = arith.constant 0 : index
    %48 = vector.load %arg11[%c0_28, %c0_29] : memref<1x64xf32, #tpu.memory_space<vmem>>, vector<1x64xf32>
    %cst_30 = arith.constant dense<0.000000e+00> : vector<8xf32>
    %49 = vector.multi_reduction <add>, %46, %cst_30 [1] : vector<8x64xf32> to vector<8xf32>
    %50 = vector.shape_cast %49 : vector<8xf32> to vector<8x1xf32>
    %cst_31 = arith.constant 6.400000e+01 : f32
    %51 = vector.broadcast %cst_31 : f32 to vector<8x1xf32>
    %52 = arith.divf %50, %51 : vector<8x1xf32>
    %53 = vector.broadcast %52 : vector<8x1xf32> to vector<8x64xf32>
    %54 = arith.subf %46, %53 : vector<8x64xf32>
    %55 = arith.mulf %54, %54 : vector<8x64xf32>
    %cst_32 = arith.constant dense<0.000000e+00> : vector<8xf32>
    %56 = vector.multi_reduction <add>, %55, %cst_32 [1] : vector<8x64xf32> to vector<8xf32>
    %57 = vector.shape_cast %56 : vector<8xf32> to vector<8x1xf32>
    %cst_33 = arith.constant 6.400000e+01 : f32
    %58 = vector.broadcast %cst_33 : f32 to vector<8x1xf32>
    %59 = arith.divf %57, %58 : vector<8x1xf32>
    %cst_34 = arith.constant 9.99999974E-6 : f32
    %60 = vector.broadcast %cst_34 : f32 to vector<8x1xf32>
    %61 = arith.addf %59, %60 : vector<8x1xf32>
    %62 = math.rsqrt %61 : vector<8x1xf32>
    %63 = vector.broadcast %52 : vector<8x1xf32> to vector<8x64xf32>
    %64 = arith.subf %46, %63 : vector<8x64xf32>
    %65 = vector.broadcast %62 : vector<8x1xf32> to vector<8x64xf32>
    %66 = arith.mulf %64, %65 : vector<8x64xf32>
    %67 = vector.broadcast %47 : vector<1x64xf32> to vector<8x64xf32>
    %68 = arith.mulf %66, %67 : vector<8x64xf32>
    %69 = vector.broadcast %48 : vector<1x64xf32> to vector<8x64xf32>
    %70 = arith.addf %68, %69 : vector<8x64xf32>
    %71 = arith.addf %70, %8 : vector<8x64xf32>
    %cst_35 = arith.constant 0.000000e+00 : f32
    %72 = vector.broadcast %cst_35 : f32 to vector<8x64xf32>
    %73 = arith.maximumf %71, %72 : vector<8x64xf32>
    %74 = arith.truncf %73 : vector<8x64xf32> to vector<8x64xbf16>
    %c0_36 = arith.constant 0 : index
    %c0_37 = arith.constant 0 : index
    %75 = vector.load %arg12[%c0_36, %c0_37] : memref<64x128xbf16, #tpu.memory_space<vmem>>, vector<64x128xbf16>
    %cst_38 = arith.constant dense<0.000000e+00> : vector<8x128xf32>
    %76 = tpu.matmul %74, %75, %cst_38 {dimension_numbers = #tpu.dot_dimension_numbers<[1], [0], [0], [1], [0, 0, 1, 1], [], []>} : vector<8x64xbf16>, vector<64x128xbf16>, vector<8x128xf32> -> vector<8x128xf32>
    %c0_39 = arith.constant 0 : index
    %c0_40 = arith.constant 0 : index
    %77 = vector.load %arg13[%c0_39, %c0_40] : memref<1x128xf32, #tpu.memory_space<vmem>>, vector<1x128xf32>
    %78 = vector.broadcast %77 : vector<1x128xf32> to vector<8x128xf32>
    %79 = arith.addf %76, %78 : vector<8x128xf32>
    %c0_41 = arith.constant 0 : index
    %c0_42 = arith.constant 0 : index
    %80 = vector.load %arg14[%c0_41, %c0_42] : memref<1x128xf32, #tpu.memory_space<vmem>>, vector<1x128xf32>
    %c0_43 = arith.constant 0 : index
    %c0_44 = arith.constant 0 : index
    %81 = vector.load %arg15[%c0_43, %c0_44] : memref<1x128xf32, #tpu.memory_space<vmem>>, vector<1x128xf32>
    %cst_45 = arith.constant dense<0.000000e+00> : vector<8xf32>
    %82 = vector.multi_reduction <add>, %79, %cst_45 [1] : vector<8x128xf32> to vector<8xf32>
    %83 = vector.shape_cast %82 : vector<8xf32> to vector<8x1xf32>
    %cst_46 = arith.constant 1.280000e+02 : f32
    %84 = vector.broadcast %cst_46 : f32 to vector<8x1xf32>
    %85 = arith.divf %83, %84 : vector<8x1xf32>
    %86 = vector.broadcast %85 : vector<8x1xf32> to vector<8x128xf32>
    %87 = arith.subf %79, %86 : vector<8x128xf32>
    %88 = arith.mulf %87, %87 : vector<8x128xf32>
    %cst_47 = arith.constant dense<0.000000e+00> : vector<8xf32>
    %89 = vector.multi_reduction <add>, %88, %cst_47 [1] : vector<8x128xf32> to vector<8xf32>
    %90 = vector.shape_cast %89 : vector<8xf32> to vector<8x1xf32>
    %cst_48 = arith.constant 1.280000e+02 : f32
    %91 = vector.broadcast %cst_48 : f32 to vector<8x1xf32>
    %92 = arith.divf %90, %91 : vector<8x1xf32>
    %cst_49 = arith.constant 9.99999974E-6 : f32
    %93 = vector.broadcast %cst_49 : f32 to vector<8x1xf32>
    %94 = arith.addf %92, %93 : vector<8x1xf32>
    %95 = math.rsqrt %94 : vector<8x1xf32>
    %96 = vector.broadcast %85 : vector<8x1xf32> to vector<8x128xf32>
    %97 = arith.subf %79, %96 : vector<8x128xf32>
    %98 = vector.broadcast %95 : vector<8x1xf32> to vector<8x128xf32>
    %99 = arith.mulf %97, %98 : vector<8x128xf32>
    %100 = vector.broadcast %80 : vector<1x128xf32> to vector<8x128xf32>
    %101 = arith.mulf %99, %100 : vector<8x128xf32>
    %102 = vector.broadcast %81 : vector<1x128xf32> to vector<8x128xf32>
    %103 = arith.addf %101, %102 : vector<8x128xf32>
    %cst_50 = arith.constant 0.000000e+00 : f32
    %104 = vector.broadcast %cst_50 : f32 to vector<8x128xf32>
    %105 = arith.maximumf %103, %104 : vector<8x128xf32>
    %106 = arith.truncf %105 : vector<8x128xf32> to vector<8x128xbf16>
    %c0_51 = arith.constant 0 : index
    %c0_52 = arith.constant 0 : index
    %107 = vector.load %arg16[%c0_51, %c0_52] : memref<128x64xbf16, #tpu.memory_space<vmem>>, vector<128x64xbf16>
    %cst_53 = arith.constant dense<0.000000e+00> : vector<8x64xf32>
    %108 = tpu.matmul %106, %107, %cst_53 {dimension_numbers = #tpu.dot_dimension_numbers<[1], [0], [0], [1], [0, 0, 1, 1], [], []>} : vector<8x128xbf16>, vector<128x64xbf16>, vector<8x64xf32> -> vector<8x64xf32>
    %c0_54 = arith.constant 0 : index
    %c0_55 = arith.constant 0 : index
    %109 = vector.load %arg17[%c0_54, %c0_55] : memref<1x64xf32, #tpu.memory_space<vmem>>, vector<1x64xf32>
    %110 = vector.broadcast %109 : vector<1x64xf32> to vector<8x64xf32>
    %111 = arith.addf %108, %110 : vector<8x64xf32>
    %c0_56 = arith.constant 0 : index
    %c0_57 = arith.constant 0 : index
    %112 = vector.load %arg18[%c0_56, %c0_57] : memref<1x64xf32, #tpu.memory_space<vmem>>, vector<1x64xf32>
    %c0_58 = arith.constant 0 : index
    %c0_59 = arith.constant 0 : index
    %113 = vector.load %arg19[%c0_58, %c0_59] : memref<1x64xf32, #tpu.memory_space<vmem>>, vector<1x64xf32>
    %cst_60 = arith.constant dense<0.000000e+00> : vector<8xf32>
    %114 = vector.multi_reduction <add>, %111, %cst_60 [1] : vector<8x64xf32> to vector<8xf32>
    %115 = vector.shape_cast %114 : vector<8xf32> to vector<8x1xf32>
    %cst_61 = arith.constant 6.400000e+01 : f32
    %116 = vector.broadcast %cst_61 : f32 to vector<8x1xf32>
    %117 = arith.divf %115, %116 : vector<8x1xf32>
    %118 = vector.broadcast %117 : vector<8x1xf32> to vector<8x64xf32>
    %119 = arith.subf %111, %118 : vector<8x64xf32>
    %120 = arith.mulf %119, %119 : vector<8x64xf32>
    %cst_62 = arith.constant dense<0.000000e+00> : vector<8xf32>
    %121 = vector.multi_reduction <add>, %120, %cst_62 [1] : vector<8x64xf32> to vector<8xf32>
    %122 = vector.shape_cast %121 : vector<8xf32> to vector<8x1xf32>
    %cst_63 = arith.constant 6.400000e+01 : f32
    %123 = vector.broadcast %cst_63 : f32 to vector<8x1xf32>
    %124 = arith.divf %122, %123 : vector<8x1xf32>
    %cst_64 = arith.constant 9.99999974E-6 : f32
    %125 = vector.broadcast %cst_64 : f32 to vector<8x1xf32>
    %126 = arith.addf %124, %125 : vector<8x1xf32>
    %127 = math.rsqrt %126 : vector<8x1xf32>
    %128 = vector.broadcast %117 : vector<8x1xf32> to vector<8x64xf32>
    %129 = arith.subf %111, %128 : vector<8x64xf32>
    %130 = vector.broadcast %127 : vector<8x1xf32> to vector<8x64xf32>
    %131 = arith.mulf %129, %130 : vector<8x64xf32>
    %132 = vector.broadcast %112 : vector<1x64xf32> to vector<8x64xf32>
    %133 = arith.mulf %131, %132 : vector<8x64xf32>
    %134 = vector.broadcast %113 : vector<1x64xf32> to vector<8x64xf32>
    %135 = arith.addf %133, %134 : vector<8x64xf32>
    %136 = arith.addf %135, %73 : vector<8x64xf32>
    %cst_65 = arith.constant 0.000000e+00 : f32
    %137 = vector.broadcast %cst_65 : f32 to vector<8x64xf32>
    %138 = arith.maximumf %136, %137 : vector<8x64xf32>
    %139 = arith.truncf %138 : vector<8x64xf32> to vector<8x64xbf16>
    %c0_66 = arith.constant 0 : index
    %c0_67 = arith.constant 0 : index
    %140 = vector.load %arg20[%c0_66, %c0_67] : memref<64x128xbf16, #tpu.memory_space<vmem>>, vector<64x128xbf16>
    %cst_68 = arith.constant dense<0.000000e+00> : vector<8x128xf32>
    %141 = tpu.matmul %139, %140, %cst_68 {dimension_numbers = #tpu.dot_dimension_numbers<[1], [0], [0], [1], [0, 0, 1, 1], [], []>} : vector<8x64xbf16>, vector<64x128xbf16>, vector<8x128xf32> -> vector<8x128xf32>
    %c0_69 = arith.constant 0 : index
    %c0_70 = arith.constant 0 : index
    %142 = vector.load %arg21[%c0_69, %c0_70] : memref<1x128xf32, #tpu.memory_space<vmem>>, vector<1x128xf32>
    %143 = vector.broadcast %142 : vector<1x128xf32> to vector<8x128xf32>
    %144 = arith.addf %141, %143 : vector<8x128xf32>
    %c0_71 = arith.constant 0 : index
    %c0_72 = arith.constant 0 : index
    %145 = vector.load %arg22[%c0_71, %c0_72] : memref<8x128xf32, #tpu.memory_space<vmem>>, vector<8x128xf32>
    tpu.vector_store %arg22[%c0_71, %c0_72], %144 {strides = array<i32>} : memref<8x128xf32, #tpu.memory_space<vmem>>, vector<8x128xf32>,
    return
  }
  func.func @transform_0(%arg0: i32) -> (i32, i32) {
    %c0_i32 = arith.constant 0 : i32
    %c0_i32_0 = arith.constant 0 : i32
    return %arg0, %c0_i32 : i32, i32
  }
  func.func @transform_1(%arg0: i32) -> (i32, i32) {
    %c0_i32 = arith.constant 0 : i32
    %c0_i32_0 = arith.constant 0 : i32
    %c0_i32_1 = arith.constant 0 : i32
    return %c0_i32, %c0_i32_0 : i32, i32
  }
  func.func @transform_2(%arg0: i32) -> (i32, i32) {
    %c0_i32 = arith.constant 0 : i32
    %c0_i32_0 = arith.constant 0 : i32
    %c0_i32_1 = arith.constant 0 : i32
    return %c0_i32, %c0_i32_0 : i32, i32
  }
  func.func @transform_3(%arg0: i32) -> (i32, i32) {
    %c0_i32 = arith.constant 0 : i32
    %c0_i32_0 = arith.constant 0 : i32
    %c0_i32_1 = arith.constant 0 : i32
    return %c0_i32, %c0_i32_0 : i32, i32
  }
  func.func @transform_4(%arg0: i32) -> (i32, i32) {
    %c0_i32 = arith.constant 0 : i32
    %c0_i32_0 = arith.constant 0 : i32
    %c0_i32_1 = arith.constant 0 : i32
    return %c0_i32, %c0_i32_0 : i32, i32
  }
  func.func @transform_5(%arg0: i32) -> (i32, i32) {
    %c0_i32 = arith.constant 0 : i32
    %c0_i32_0 = arith.constant 0 : i32
    %c0_i32_1 = arith.constant 0 : i32
    return %c0_i32, %c0_i32_0 : i32, i32
  }
  func.func @transform_6(%arg0: i32) -> (i32, i32) {
    %c0_i32 = arith.constant 0 : i32
    %c0_i32_0 = arith.constant 0 : i32
    %c0_i32_1 = arith.constant 0 : i32
    return %c0_i32, %c0_i32_0 : i32, i32
  }
  func.func @transform_7(%arg0: i32) -> (i32, i32) {
    %c0_i32 = arith.constant 0 : i32
    %c0_i32_0 = arith.constant 0 : i32
    %c0_i32_1 = arith.constant 0 : i32
    return %c0_i32, %c0_i32_0 : i32, i32
  }
  func.func @transform_8(%arg0: i32) -> (i32, i32) {
    %c0_i32 = arith.constant 0 : i32
    %c0_i32_0 = arith.constant 0 : i32
    %c0_i32_1 = arith.constant 0 : i32
    return %c0_i32, %c0_i32_0 : i32, i32
  }
  func.func @transform_9(%arg0: i32) -> (i32, i32) {
    %c0_i32 = arith.constant 0 : i32
    %c0_i32_0 = arith.constant 0 : i32
    %c0_i32_1 = arith.constant 0 : i32
    return %c0_i32, %c0_i32_0 : i32, i32
  }
  func.func @transform_10(%arg0: i32) -> (i32, i32) {
    %c0_i32 = arith.constant 0 : i32
    %c0_i32_0 = arith.constant 0 : i32
    %c0_i32_1 = arith.constant 0 : i32
    return %c0_i32, %c0_i32_0 : i32, i32
  }
  func.func @transform_11(%arg0: i32) -> (i32, i32) {
    %c0_i32 = arith.constant 0 : i32
    %c0_i32_0 = arith.constant 0 : i32
    %c0_i32_1 = arith.constant 0 : i32
    return %c0_i32, %c0_i32_0 : i32, i32
  }
  func.func @transform_12(%arg0: i32) -> (i32, i32) {
    %c0_i32 = arith.constant 0 : i32
    %c0_i32_0 = arith.constant 0 : i32
    %c0_i32_1 = arith.constant 0 : i32
    return %c0_i32, %c0_i32_0 : i32, i32
  }
  func.func @transform_13(%arg0: i32) -> (i32, i32) {
    %c0_i32 = arith.constant 0 : i32
    %c0_i32_0 = arith.constant 0 : i32
    %c0_i32_1 = arith.constant 0 : i32
    return %c0_i32, %c0_i32_0 : i32, i32
  }
  func.func @transform_14(%arg0: i32) -> (i32, i32) {
    %c0_i32 = arith.constant 0 : i32
    %c0_i32_0 = arith.constant 0 : i32
    %c0_i32_1 = arith.constant 0 : i32
    return %c0_i32, %c0_i32_0 : i32, i32
  }
  func.func @transform_15(%arg0: i32) -> (i32, i32) {
    %c0_i32 = arith.constant 0 : i32
    %c0_i32_0 = arith.constant 0 : i32
    %c0_i32_1 = arith.constant 0 : i32
    return %c0_i32, %c0_i32_0 : i32, i32
  }
  func.func @transform_16(%arg0: i32) -> (i32, i32) {
    %c0_i32 = arith.constant 0 : i32
    %c0_i32_0 = arith.constant 0 : i32
    %c0_i32_1 = arith.constant 0 : i32
    return %c0_i32, %c0_i32_0 : i32, i32
  }
  func.func @transform_17(%arg0: i32) -> (i32, i32) {
    %c0_i32 = arith.constant 0 : i32
    %c0_i32_0 = arith.constant 0 : i32
    %c0_i32_1 = arith.constant 0 : i32
    return %c0_i32, %c0_i32_0 : i32, i32
  }
  func.func @transform_18(%arg0: i32) -> (i32, i32) {
    %c0_i32 = arith.constant 0 : i32
    %c0_i32_0 = arith.constant 0 : i32
    %c0_i32_1 = arith.constant 0 : i32
    return %c0_i32, %c0_i32_0 : i32, i32
  }
  func.func @transform_19(%arg0: i32) -> (i32, i32) {
    %c0_i32 = arith.constant 0 : i32
    %c0_i32_0 = arith.constant 0 : i32
    %c0_i32_1 = arith.constant 0 : i32
    return %c0_i32, %c0_i32_0 : i32, i32
  }
  func.func @transform_20(%arg0: i32) -> (i32, i32) {
    %c0_i32 = arith.constant 0 : i32
    %c0_i32_0 = arith.constant 0 : i32
    %c0_i32_1 = arith.constant 0 : i32
    return %c0_i32, %c0_i32_0 : i32, i32
  }
  func.func @transform_21(%arg0: i32) -> (i32, i32) {
    %c0_i32 = arith.constant 0 : i32
    %c0_i32_0 = arith.constant 0 : i32
    return %arg0, %c0_i32 : i32, i32
  }
}

</mosaic_0001>

<llo_original>
// kernel: tpu_custom_call.1
$region0: #{tpu_custom_call.1}
  #allocation0 [shape = 'u32[]', space=smem, size = 0x4, offset = 0x4, fixed_abs, tag = 'smem constant byte address 0x4 - core index']
  #allocation1 [shape = 'u32[144,128]{1,0:T(1,128)}', space=vmem, size = 0x12000, scoped, tag = 'internal scratch']
  %s0 = inlined_call_operand.vmem [shape: f32[8,15], index: 0, kind: input, shape index: {}]
  %s1 = inlined_call_operand.vmem [shape: bf16[15,64], index: 1, kind: input, shape index: {}]
  %s2 = inlined_call_operand.vmem [shape: f32[1,64], index: 2, kind: input, shape index: {}]
  %s3 = inlined_call_operand.vmem [shape: bf16[64,128], index: 3, kind: input, shape index: {}]
  %s4 = inlined_call_operand.vmem [shape: f32[1,128], index: 4, kind: input, shape index: {}]
  %s5 = inlined_call_operand.vmem [shape: f32[1,128], index: 5, kind: input, shape index: {}]
  %s6 = inlined_call_operand.vmem [shape: f32[1,128], index: 6, kind: input, shape index: {}]
  %s7 = inlined_call_operand.vmem [shape: bf16[128,64], index: 7, kind: input, shape index: {}]
  %s8 = inlined_call_operand.vmem [shape: f32[1,64], index: 8, kind: input, shape index: {}]
  %s9 = inlined_call_operand.vmem [shape: f32[1,64], index: 9, kind: input, shape index: {}]
  %s10 = inlined_call_operand.vmem [shape: f32[1,64], index: 10, kind: input, shape index: {}]
  %s11 = inlined_call_operand.vmem [shape: bf16[64,128], index: 11, kind: input, shape index: {}]
  %s12 = inlined_call_operand.vmem [shape: f32[1,128], index: 12, kind: input, shape index: {}]
  %s13 = inlined_call_operand.vmem [shape: f32[1,128], index: 13, kind: input, shape index: {}]
  %s14 = inlined_call_operand.vmem [shape: f32[1,128], index: 14, kind: input, shape index: {}]
  %s15 = inlined_call_operand.vmem [shape: bf16[128,64], index: 15, kind: input, shape index: {}]
  %s16 = inlined_call_operand.vmem [shape: f32[1,64], index: 16, kind: input, shape index: {}]
  %s17 = inlined_call_operand.vmem [shape: f32[1,64], index: 17, kind: input, shape index: {}]
  %s18 = inlined_call_operand.vmem [shape: f32[1,64], index: 18, kind: input, shape index: {}]
  %s19 = inlined_call_operand.vmem [shape: bf16[64,128], index: 19, kind: input, shape index: {}]
  %s20 = inlined_call_operand.vmem [shape: f32[1,128], index: 20, kind: input, shape index: {}]
  %s21 = inlined_call_operand.hbm [shape: f32[8,128], index: 21, kind: output, shape index: {}]
  %s22 = sld [smem:[#allocation0]]
  $region94: #{tpu_custom_call.1} parent=0
    _
  %s24 = ssub.s32 1, %s22
  %s25 = scalar_select 0, %s24, %s22
  $region1: #{tpu_custom_call.1} parent=0
    #allocation2 [shape = 'u8[4096]{0}', space=vmem, size = 0x1000, scoped, tag = 'output window, operand 0, single buffered']
    #allocation3 [shape = 's32[1]{0}', space=sflag, size = 0x4, scoped, tag = 'scoped memory for tpu_custom_call.1']
    %26 = vsyncpa [#allocation3], 0
    // Predicated region
    $region2: #{tpu_custom_call.1} parent=1 // pred_check
      _
    $region3: #{tpu_custom_call.1} parent=1 // pred_check_branch
      %28 = sbr.rel (0) target = $region5
    $region4: #{tpu_custom_call.1} parent=1 // pred_region
      _
    $region5: #{tpu_custom_call.1} parent=1 // pred_fallthru
      _
    // Predicated region
    $region6: #{tpu_custom_call.1} parent=1 // pred_check
      _
    $region7: #{tpu_custom_call.1} parent=1 // pred_check_branch
      %30 = sbr.rel (0) target = $region9
    $region8: #{tpu_custom_call.1} parent=1 // pred_region
      _
    $region9: #{tpu_custom_call.1} parent=1 // pred_fallthru
      _
    // Predicated region
    $region10: #{tpu_custom_call.1} parent=1 // pred_check
      _
    $region11: #{tpu_custom_call.1} parent=1 // pred_check_branch
      %32 = sbr.rel (0) target = $region13
    $region12: #{tpu_custom_call.1} parent=1 // pred_region
      _
    $region13: #{tpu_custom_call.1} parent=1 // pred_fallthru
      _
    // Predicated region
    $region14: #{tpu_custom_call.1} parent=1 // pred_check
      _
    $region15: #{tpu_custom_call.1} parent=1 // pred_check_branch
      %34 = sbr.rel (0) target = $region17
    $region16: #{tpu_custom_call.1} parent=1 // pred_region
      _
    $region17: #{tpu_custom_call.1} parent=1 // pred_fallthru
      _
    // Predicated region
    $region18: #{tpu_custom_call.1} parent=1 // pred_check
      _
    $region19: #{tpu_custom_call.1} parent=1 // pred_check_branch
      %36 = sbr.rel (0) target = $region21
    $region20: #{tpu_custom_call.1} parent=1 // pred_region
      _
    $region21: #{tpu_custom_call.1} parent=1 // pred_fallthru
      _
    // Predicated region
    $region22: #{tpu_custom_call.1} parent=1 // pred_check
      _
    $region23: #{tpu_custom_call.1} parent=1 // pred_check_branch
      %38 = sbr.rel (0) target = $region25
    $region24: #{tpu_custom_call.1} parent=1 // pred_region
      _
    $region25: #{tpu_custom_call.1} parent=1 // pred_fallthru
      _
    // Predicated region
    $region26: #{tpu_custom_call.1} parent=1 // pred_check
      _
    $region27: #{tpu_custom_call.1} parent=1 // pred_check_branch
      %40 = sbr.rel (0) target = $region29
    $region28: #{tpu_custom_call.1} parent=1 // pred_region
      _
    $region29: #{tpu_custom_call.1} parent=1 // pred_fallthru
      _
    // Predicated region
    $region30: #{tpu_custom_call.1} parent=1 // pred_check
      _
    $region31: #{tpu_custom_call.1} parent=1 // pred_check_branch
      %42 = sbr.rel (0) target = $region33
    $region32: #{tpu_custom_call.1} parent=1 // pred_region
      _
    $region33: #{tpu_custom_call.1} parent=1 // pred_fallthru
      _
    // Predicated region
    $region34: #{tpu_custom_call.1} parent=1 // pred_check
      _
    $region35: #{tpu_custom_call.1} parent=1 // pred_check_branch
      %44 = sbr.rel (0) target = $region37
    $region36: #{tpu_custom_call.1} parent=1 // pred_region
      _
    $region37: #{tpu_custom_call.1} parent=1 // pred_fallthru
      _
    // Predicated region
    $region38: #{tpu_custom_call.1} parent=1 // pred_check
      _
    $region39: #{tpu_custom_call.1} parent=1 // pred_check_branch
      %46 = sbr.rel (0) target = $region41
    $region40: #{tpu_custom_call.1} parent=1 // pred_region
      _
    $region41: #{tpu_custom_call.1} parent=1 // pred_fallthru
      _
    // Predicated region
    $region42: #{tpu_custom_call.1} parent=1 // pred_check
      _
    $region43: #{tpu_custom_call.1} parent=1 // pred_check_branch
      %48 = sbr.rel (0) target = $region45
    $region44: #{tpu_custom_call.1} parent=1 // pred_region
      _
    $region45: #{tpu_custom_call.1} parent=1 // pred_fallthru
      _
    // Predicated region
    $region46: #{tpu_custom_call.1} parent=1 // pred_check
      _
    $region47: #{tpu_custom_call.1} parent=1 // pred_check_branch
      %50 = sbr.rel (0) target = $region49
    $region48: #{tpu_custom_call.1} parent=1 // pred_region
      _
    $region49: #{tpu_custom_call.1} parent=1 // pred_fallthru
      _
    // Predicated region
    $region50: #{tpu_custom_call.1} parent=1 // pred_check
      _
    $region51: #{tpu_custom_call.1} parent=1 // pred_check_branch
      %52 = sbr.rel (0) target = $region53
    $region52: #{tpu_custom_call.1} parent=1 // pred_region
      _
    $region53: #{tpu_custom_call.1} parent=1 // pred_fallthru
      _
    // Predicated region
    $region54: #{tpu_custom_call.1} parent=1 // pred_check
      _
    $region55: #{tpu_custom_call.1} parent=1 // pred_check_branch
      %54 = sbr.rel (0) target = $region57
    $region56: #{tpu_custom_call.1} parent=1 // pred_region
      _
    $region57: #{tpu_custom_call.1} parent=1 // pred_fallthru
      _
    // Predicated region
    $region58: #{tpu_custom_call.1} parent=1 // pred_check
      _
    $region59: #{tpu_custom_call.1} parent=1 // pred_check_branch
      %56 = sbr.rel (0) target = $region61
    $region60: #{tpu_custom_call.1} parent=1 // pred_region
      _
    $region61: #{tpu_custom_call.1} parent=1 // pred_fallthru
      _
    // Predicated region
    $region62: #{tpu_custom_call.1} parent=1 // pred_check
      _
    $region63: #{tpu_custom_call.1} parent=1 // pred_check_branch
      %58 = sbr.rel (0) target = $region65
    $region64: #{tpu_custom_call.1} parent=1 // pred_region
      _
    $region65: #{tpu_custom_call.1} parent=1 // pred_fallthru
      _
    // Predicated region
    $region66: #{tpu_custom_call.1} parent=1 // pred_check
      _
    $region67: #{tpu_custom_call.1} parent=1 // pred_check_branch
      %60 = sbr.rel (0) target = $region69
    $region68: #{tpu_custom_call.1} parent=1 // pred_region
      _
    $region69: #{tpu_custom_call.1} parent=1 // pred_fallthru
      _
    // Predicated region
    $region70: #{tpu_custom_call.1} parent=1 // pred_check
      _
    $region71: #{tpu_custom_call.1} parent=1 // pred_check_branch
      %62 = sbr.rel (0) target = $region73
    $region72: #{tpu_custom_call.1} parent=1 // pred_region
      _
    $region73: #{tpu_custom_call.1} parent=1 // pred_fallthru
      _
    // Predicated region
    $region74: #{tpu_custom_call.1} parent=1 // pred_check
      _
    $region75: #{tpu_custom_call.1} parent=1 // pred_check_branch
      %64 = sbr.rel (0) target = $region77
    $region76: #{tpu_custom_call.1} parent=1 // pred_region
      _
    $region77: #{tpu_custom_call.1} parent=1 // pred_fallthru
      _
    // Predicated region
    $region78: #{tpu_custom_call.1} parent=1 // pred_check
      _
    $region79: #{tpu_custom_call.1} parent=1 // pred_check_branch
      %66 = sbr.rel (0) target = $region81
    $region80: #{tpu_custom_call.1} parent=1 // pred_region
      _
    $region81: #{tpu_custom_call.1} parent=1 // pred_fallthru
      _
    // Predicated region
    $region82: #{tpu_custom_call.1} parent=1 // pred_check
      _
    $region83: #{tpu_custom_call.1} parent=1 // pred_check_branch
      %68 = sbr.rel (0) target = $region85
    $region84: #{tpu_custom_call.1} parent=1 // pred_region
      _
    $region85: #{tpu_custom_call.1} parent=1 // pred_fallthru
      _
    %v70 = vld [vmem:[%s0] sm:$0xff]
    %v71 = vpack.c.bf16 %v70, %v70
    %v72 = vld [vmem:[%s1] sm:$0xf]
    %v73 = vld [vmem:[%s1 + $0x4] sm:$0xf]
    %v74 = vld [vmem:[%s2] sm:$0x1]
    %v76 = vlaneseq
    %v77 = vshrl.u32 %v76, 7
    %v78 = vsub.s32 0, %v77
    %v79 = vrot.slane %v74, %v78
    %v83 = vunpack.c.l.b16 %v72
    %v84 = vunpack.c.l.b16 %v73
    %v85 = vpack.c.b16 %v84, %v83
    %vm86 = vcmask 121856
    %v88 = vsel %vm86, %v71, 0
    %vm90 = vcmask 1046528
    %vm91 = vcmask 1047552
    %v92 = vsel %vm90, 4294967295, 65535
    %v93 = vsel %vm91, %v92, 0
    %v95 = vand.u32 %v85, %v93
    %97 = vmatprep.subr.bf16.mxu0 0
    %98 = vmatpush1.bf16.msra.mxu0 0
    %99 = vmatprep.subr.bf16.mxu0 0
    %100 = vmatpush1.bf16.msra.mxu0 0
    %101 = vmatprep.subr.bf16.mxu0 0
    %102 = vmatpush1.bf16.msra.mxu0 0
    %103 = vmatprep.subr.bf16.mxu0 0
    %104 = vmatpush1.bf16.msra.mxu0 0
    %105 = vmatprep.subr.bf16.mxu0 0
    %106 = vmatpush1.bf16.msra.mxu0 0
    %107 = vmatprep.subr.bf16.mxu0 0
    %108 = vmatpush1.bf16.msra.mxu0 0
    %109 = vmatprep.subr.bf16.mxu0 0
    %110 = vmatpush1.bf16.msra.mxu0 0
    %111 = vmatprep.subr.bf16.mxu0 0
    %112 = vmatpush1.bf16.msra.mxu0 %v95
    %113 = vmatprep.subr.bf16.mxu0 0
    %114 = vmatpush2.bf16.msra.mxu0 0
    %115 = vmatprep.subr.bf16.mxu0 0
    %116 = vmatpush2.bf16.msra.mxu0 0
    %117 = vmatprep.subr.bf16.mxu0 0
    %118 = vmatpush2.bf16.msra.mxu0 0
    %119 = vmatprep.subr.bf16.mxu0 0
    %120 = vmatpush2.bf16.msra.mxu0 0
    %121 = vmatprep.subr.bf16.mxu0 0
    %122 = vmatpush2.bf16.msra.mxu0 0
    %123 = vmatprep.subr.bf16.mxu0 0
    %124 = vmatpush2.bf16.msra.mxu0 0
    %125 = vmatprep.subr.bf16.mxu0 0
    %126 = vmatpush2.bf16.msra.mxu0 0
    %127 = vmatprep.subr.bf16.mxu0 0
    %128 = vmatpush2.bf16.msra.mxu0 0
    %129 = vmatprep.mubr.bf16.mxu0 0
    %130 = vmatmul.mubr.bf16.gmra.mxu0 %v88
    %v131 = vpop.f32.mrf.mxu0
    %v132 = vadd.f32 %v79, %v131
    %v133 = vpop.f32.mrf.mxu0
    %v134 = vpop.f32.mrf.mxu0
    %v135 = vpop.f32.mrf.mxu0
    %136 = vdwg.mxu0
    %v137 = vmax.f32 %v132, 0.0
    %v138 = vpack.c.bf16 %v137, %v137
    %v139 = vld [vmem:[%s3] sm:$0xf]
    %v140 = vld [vmem:[%s3 + $0x4] sm:$0xf]
    %v141 = vld [vmem:[%s3 + $0x8] sm:$0xf]
    %v142 = vld [vmem:[%s3 + $0xc] sm:$0xf]
    %v143 = vld [vmem:[%s3 + $0x10] sm:$0xf]
    %v144 = vld [vmem:[%s3 + $0x14] sm:$0xf]
    %v145 = vld [vmem:[%s3 + $0x18] sm:$0xf]
    %v146 = vld [vmem:[%s3 + $0x1c] sm:$0xf]
    %v147 = vld [vmem:[%s4] sm:$0x1]
    %v149 = vlaneseq
    %v150 = vshrl.u32 %v149, 7
    %v151 = vsub.s32 0, %v150
    %v152 = vrot.slane %v147, %v151
    %v162 = vunpack.c.l.b16 %v139
    %v163 = vunpack.c.l.b16 %v140
    %v164 = vunpack.c.l.b16 %v141
    %v165 = vunpack.c.l.b16 %v142
    %v166 = vunpack.c.l.b16 %v143
    %v167 = vunpack.c.l.b16 %v144
    %v168 = vunpack.c.l.b16 %v145
    %v169 = vunpack.c.l.b16 %v146
    %v170 = vpack.c.b16 %v163, %v162
    %v171 = vpack.c.b16 %v165, %v164
    %v172 = vpack.c.b16 %v167, %v166
    %v173 = vpack.c.b16 %v169, %v168
    %vm178 = vcmask 523264
    %v180 = vsel %vm178, %v138, 0
    %182 = vmatprep.subr.bf16.mxu0 0
    %183 = vmatpush1.bf16.msra.mxu0 0
    %184 = vmatprep.subr.bf16.mxu0 0
    %185 = vmatpush1.bf16.msra.mxu0 0
    %186 = vmatprep.subr.bf16.mxu0 0
    %187 = vmatpush1.bf16.msra.mxu0 0
    %188 = vmatprep.subr.bf16.mxu0 0
    %189 = vmatpush1.bf16.msra.mxu0 0
    %190 = vmatprep.subr.bf16.mxu0 0
    %191 = vmatpush1.bf16.msra.mxu0 %v173
    %192 = vmatprep.subr.bf16.mxu0 0
    %193 = vmatpush1.bf16.msra.mxu0 %v172
    %194 = vmatprep.subr.bf16.mxu0 0
    %195 = vmatpush1.bf16.msra.mxu0 %v171
    %196 = vmatprep.subr.bf16.mxu0 0
    %197 = vmatpush1.bf16.msra.mxu0 %v170
    %198 = vmatprep.subr.bf16.mxu0 0
    %199 = vmatpush2.bf16.msra.mxu0 0
    %200 = vmatprep.subr.bf16.mxu0 0
    %201 = vmatpush2.bf16.msra.mxu0 0
    %202 = vmatprep.subr.bf16.mxu0 0
    %203 = vmatpush2.bf16.msra.mxu0 0
    %204 = vmatprep.subr.bf16.mxu0 0
    %205 = vmatpush2.bf16.msra.mxu0 0
    %206 = vmatprep.subr.bf16.mxu0 0
    %207 = vmatpush2.bf16.msra.mxu0 0
    %208 = vmatprep.subr.bf16.mxu0 0
    %209 = vmatpush2.bf16.msra.mxu0 0
    %210 = vmatprep.subr.bf16.mxu0 0
    %211 = vmatpush2.bf16.msra.mxu0 0
    %212 = vmatprep.subr.bf16.mxu0 0
    %213 = vmatpush2.bf16.msra.mxu0 0
    %214 = vmatprep.mubr.bf16.mxu0 0
    %215 = vmatmul.mubr.bf16.gmra.mxu0 %v180
    %v216 = vpop.f32.mrf.mxu0
    %v217 = vadd.f32 %v152, %v216
    %v218 = vpop.f32.mrf.mxu0
    %v219 = vpop.f32.mrf.mxu0
    %v220 = vpop.f32.mrf.mxu0
    %221 = vdwg.mxu0
    %v222 = vld [vmem:[%s5] sm:$0x1]
    %v223 = vld [vmem:[%s6] sm:$0x1]
    %224 = vadd.xlane.f32.xlu0 %v217
    %v225 = vpop.xlane.xlu0 %224
    %v226 = vrcp.pop 128.0
    %v227 = vmul.f32 %v225, %v226
    %v228 = vsub.f32 %v217, %v227
    %v229 = vmul.f32 %v228, %v228
    %230 = vadd.xlane.f32.xlu0 %v229
    %v231 = vpop.xlane.xlu0 %230
    %v232 = vmul.f32 %v231, %v226
    %v233 = vadd.f32 %v232, 1e-05
    %v234 = vrsqrt.pop %v233
    %v235 = vmul.f32 %v228, %v234
    %v237 = vlaneseq
    %v238 = vshrl.u32 %v237, 7
    %v239 = vsub.s32 0, %v238
    %v240 = vrot.slane %v222, %v239
    %v242 = vmul.f32 %v235, %v240
    %v244 = vlaneseq
    %v245 = vshrl.u32 %v244, 7
    %v246 = vsub.s32 0, %v245
    %v247 = vrot.slane %v223, %v246
    %v249 = vadd.f32 %v242, %v247
    %v250 = vmax.f32 %v249, 0.0
    %v251 = vpack.c.bf16 %v250, %v250
    %v252 = vld [vmem:[%s7] sm:$0xf]
    %v253 = vld [vmem:[%s7 + $0x4] sm:$0xf]
    %v254 = vld [vmem:[%s7 + $0x8] sm:$0xf]
    %v255 = vld [vmem:[%s7 + $0xc] sm:$0xf]
    %v256 = vld [vmem:[%s7 + $0x10] sm:$0xf]
    %v257 = vld [vmem:[%s7 + $0x14] sm:$0xf]
    %v258 = vld [vmem:[%s7 + $0x18] sm:$0xf]
    %v259 = vld [vmem:[%s7 + $0x1c] sm:$0xf]
    %v260 = vld [vmem:[%s7 + $0x20] sm:$0xf]
    %v261 = vld [vmem:[%s7 + $0x24] sm:$0xf]
    %v262 = vld [vmem:[%s7 + $0x28] sm:$0xf]
    %v263 = vld [vmem:[%s7 + $0x2c] sm:$0xf]
    %v264 = vld [vmem:[%s7 + $0x30] sm:$0xf]
    %v265 = vld [vmem:[%s7 + $0x34] sm:$0xf]
    %v266 = vld [vmem:[%s7 + $0x38] sm:$0xf]
    %v267 = vld [vmem:[%s7 + $0x3c] sm:$0xf]
    %v268 = vld [vmem:[%s8] sm:$0x1]
    %v270 = vlaneseq
    %v271 = vshrl.u32 %v270, 7
    %v272 = vsub.s32 0, %v271
    %v273 = vrot.slane %v268, %v272
    %v291 = vunpack.c.l.b16 %v252
    %v292 = vunpack.c.l.b16 %v253
    %v293 = vunpack.c.l.b16 %v254
    %v294 = vunpack.c.l.b16 %v255
    %v295 = vunpack.c.l.b16 %v256
    %v296 = vunpack.c.l.b16 %v257
    %v297 = vunpack.c.l.b16 %v258
    %v298 = vunpack.c.l.b16 %v259
    %v299 = vunpack.c.l.b16 %v260
    %v300 = vunpack.c.l.b16 %v261
    %v301 = vunpack.c.l.b16 %v262
    %v302 = vunpack.c.l.b16 %v263
    %v303 = vunpack.c.l.b16 %v264
    %v304 = vunpack.c.l.b16 %v265
    %v305 = vunpack.c.l.b16 %v266
    %v306 = vunpack.c.l.b16 %v267
    %v307 = vpack.c.b16 %v292, %v291
    %v308 = vpack.c.b16 %v294, %v293
    %v309 = vpack.c.b16 %v296, %v295
    %v310 = vpack.c.b16 %v298, %v297
    %v311 = vpack.c.b16 %v300, %v299
    %v312 = vpack.c.b16 %v302, %v301
    %v313 = vpack.c.b16 %v304, %v303
    %v314 = vpack.c.b16 %v306, %v305
    %323 = vmatprep.subr.bf16.mxu0 0
    %324 = vmatpush1.bf16.msra.mxu0 %v314
    %325 = vmatprep.subr.bf16.mxu0 0
    %326 = vmatpush1.bf16.msra.mxu0 %v313
    %327 = vmatprep.subr.bf16.mxu0 0
    %328 = vmatpush1.bf16.msra.mxu0 %v312
    %329 = vmatprep.subr.bf16.mxu0 0
    %330 = vmatpush1.bf16.msra.mxu0 %v311
    %331 = vmatprep.subr.bf16.mxu0 0
    %332 = vmatpush1.bf16.msra.mxu0 %v310
    %333 = vmatprep.subr.bf16.mxu0 0
    %334 = vmatpush1.bf16.msra.mxu0 %v309
    %335 = vmatprep.subr.bf16.mxu0 0
    %336 = vmatpush1.bf16.msra.mxu0 %v308
    %337 = vmatprep.subr.bf16.mxu0 0
    %338 = vmatpush1.bf16.msra.mxu0 %v307
    %339 = vmatprep.subr.bf16.mxu0 0
    %340 = vmatpush2.bf16.msra.mxu0 0
    %341 = vmatprep.subr.bf16.mxu0 0
    %342 = vmatpush2.bf16.msra.mxu0 0
    %343 = vmatprep.subr.bf16.mxu0 0
    %344 = vmatpush2.bf16.msra.mxu0 0
    %345 = vmatprep.subr.bf16.mxu0 0
    %346 = vmatpush2.bf16.msra.mxu0 0
    %347 = vmatprep.subr.bf16.mxu0 0
    %348 = vmatpush2.bf16.msra.mxu0 0
    %349 = vmatprep.subr.bf16.mxu0 0
    %350 = vmatpush2.bf16.msra.mxu0 0
    %351 = vmatprep.subr.bf16.mxu0 0
    %352 = vmatpush2.bf16.msra.mxu0 0
    %353 = vmatprep.subr.bf16.mxu0 0
    %354 = vmatpush2.bf16.msra.mxu0 0
    %355 = vmatprep.mubr.bf16.mxu0 0
    %356 = vmatmul.mubr.bf16.gmra.mxu0 %v251
    %v357 = vpop.f32.mrf.mxu0
    %v358 = vadd.f32 %v273, %v357
    %v359 = vpop.f32.mrf.mxu0
    %v360 = vpop.f32.mrf.mxu0
    %v361 = vpop.f32.mrf.mxu0
    %362 = vdwg.mxu0
    %v363 = vld [vmem:[%s9] sm:$0x1]
    %v364 = vld [vmem:[%s10] sm:$0x1]
    %v365 = vsel %vm178, %v358, 0.0
    %366 = vadd.xlane.f32.xlu0 %v365
    %v367 = vpop.xlane.xlu0 %366
    %v368 = vrcp.pop 64.0
    %v369 = vmul.f32 %v367, %v368
    %v370 = vsub.f32 %v358, %v369
    %v371 = vmul.f32 %v370, %v370
    %v372 = vsel %vm178, %v371, 0.0
    %373 = vadd.xlane.f32.xlu0 %v372
    %v374 = vpop.xlane.xlu0 %373
    %v375 = vmul.f32 %v374, %v368
    %v376 = vadd.f32 %v375, 1e-05
    %v377 = vrsqrt.pop %v376
    %v378 = vmul.f32 %v370, %v377
    %v380 = vlaneseq
    %v381 = vshrl.u32 %v380, 7
    %v382 = vsub.s32 0, %v381
    %v383 = vrot.slane %v363, %v382
    %v385 = vmul.f32 %v378, %v383
    %v387 = vlaneseq
    %v388 = vshrl.u32 %v387, 7
    %v389 = vsub.s32 0, %v388
    %v390 = vrot.slane %v364, %v389
    %v392 = vadd.f32 %v385, %v390
    %v393 = vadd.f32 %v392, %v137
    %v394 = vmax.f32 %v393, 0.0
    %v395 = vpack.c.bf16 %v394, %v394
    %v396 = vld [vmem:[%s11] sm:$0xf]
    %v397 = vld [vmem:[%s11 + $0x4] sm:$0xf]
    %v398 = vld [vmem:[%s11 + $0x8] sm:$0xf]
    %v399 = vld [vmem:[%s11 + $0xc] sm:$0xf]
    %v400 = vld [vmem:[%s11 + $0x10] sm:$0xf]
    %v401 = vld [vmem:[%s11 + $0x14] sm:$0xf]
    %v402 = vld [vmem:[%s11 + $0x18] sm:$0xf]
    %v403 = vld [vmem:[%s11 + $0x1c] sm:$0xf]
    %v404 = vld [vmem:[%s12] sm:$0x1]
    %v406 = vlaneseq
    %v407 = vshrl.u32 %v406, 7
    %v408 = vsub.s32 0, %v407
    %v409 = vrot.slane %v404, %v408
    %v419 = vunpack.c.l.b16 %v396
    %v420 = vunpack.c.l.b16 %v397
    %v421 = vunpack.c.l.b16 %v398
    %v422 = vunpack.c.l.b16 %v399
    %v423 = vunpack.c.l.b16 %v400
    %v424 = vunpack.c.l.b16 %v401
    %v425 = vunpack.c.l.b16 %v402
    %v426 = vunpack.c.l.b16 %v403
    %v427 = vpack.c.b16 %v420, %v419
    %v428 = vpack.c.b16 %v422, %v421
    %v429 = vpack.c.b16 %v424, %v423
    %v430 = vpack.c.b16 %v426, %v425
    %v436 = vsel %vm178, %v395, 0
    %438 = vmatprep.subr.bf16.mxu0 0
    %439 = vmatpush1.bf16.msra.mxu0 0
    %440 = vmatprep.subr.bf16.mxu0 0
    %441 = vmatpush1.bf16.msra.mxu0 0
    %442 = vmatprep.subr.bf16.mxu0 0
    %443 = vmatpush1.bf16.msra.mxu0 0
    %444 = vmatprep.subr.bf16.mxu0 0
    %445 = vmatpush1.bf16.msra.mxu0 0
    %446 = vmatprep.subr.bf16.mxu0 0
    %447 = vmatpush1.bf16.msra.mxu0 %v430
    %448 = vmatprep.subr.bf16.mxu0 0
    %449 = vmatpush1.bf16.msra.mxu0 %v429
    %450 = vmatprep.subr.bf16.mxu0 0
    %451 = vmatpush1.bf16.msra.mxu0 %v428
    %452 = vmatprep.subr.bf16.mxu0 0
    %453 = vmatpush1.bf16.msra.mxu0 %v427
    %454 = vmatprep.subr.bf16.mxu0 0
    %455 = vmatpush2.bf16.msra.mxu0 0
    %456 = vmatprep.subr.bf16.mxu0 0
    %457 = vmatpush2.bf16.msra.mxu0 0
    %458 = vmatprep.subr.bf16.mxu0 0
    %459 = vmatpush2.bf16.msra.mxu0 0
    %460 = vmatprep.subr.bf16.mxu0 0
    %461 = vmatpush2.bf16.msra.mxu0 0
    %462 = vmatprep.subr.bf16.mxu0 0
    %463 = vmatpush2.bf16.msra.mxu0 0
    %464 = vmatprep.subr.bf16.mxu0 0
    %465 = vmatpush2.bf16.msra.mxu0 0
    %466 = vmatprep.subr.bf16.mxu0 0
    %467 = vmatpush2.bf16.msra.mxu0 0
    %468 = vmatprep.subr.bf16.mxu0 0
    %469 = vmatpush2.bf16.msra.mxu0 0
    %470 = vmatprep.mubr.bf16.mxu0 0
    %471 = vmatmul.mubr.bf16.gmra.mxu0 %v436
    %v472 = vpop.f32.mrf.mxu0
    %v473 = vadd.f32 %v409, %v472
    %v474 = vpop.f32.mrf.mxu0
    %v475 = vpop.f32.mrf.mxu0
    %v476 = vpop.f32.mrf.mxu0
    %477 = vdwg.mxu0
    %v478 = vld [vmem:[%s13] sm:$0x1]
    %v479 = vld [vmem:[%s14] sm:$0x1]
    %480 = vadd.xlane.f32.xlu0 %v473
    %v481 = vpop.xlane.xlu0 %480
    %v482 = vmul.f32 %v481, %v226
    %v483 = vsub.f32 %v473, %v482
    %v484 = vmul.f32 %v483, %v483
    %485 = vadd.xlane.f32.xlu0 %v484
    %v486 = vpop.xlane.xlu0 %485
    %v487 = vmul.f32 %v486, %v226
    %v488 = vadd.f32 %v487, 1e-05
    %v489 = vrsqrt.pop %v488
    %v490 = vmul.f32 %v483, %v489
    %v492 = vlaneseq
    %v493 = vshrl.u32 %v492, 7
    %v494 = vsub.s32 0, %v493
    %v495 = vrot.slane %v478, %v494
    %v497 = vmul.f32 %v490, %v495
    %v499 = vlaneseq
    %v500 = vshrl.u32 %v499, 7
    %v501 = vsub.s32 0, %v500
    %v502 = vrot.slane %v479, %v501
    %v504 = vadd.f32 %v497, %v502
    %v505 = vmax.f32 %v504, 0.0
    %v506 = vpack.c.bf16 %v505, %v505
    %v507 = vld [vmem:[%s15] sm:$0xf]
    %v508 = vld [vmem:[%s15 + $0x4] sm:$0xf]
    %v509 = vld [vmem:[%s15 + $0x8] sm:$0xf]
    %v510 = vld [vmem:[%s15 + $0xc] sm:$0xf]
    %v511 = vld [vmem:[%s15 + $0x10] sm:$0xf]
    %v512 = vld [vmem:[%s15 + $0x14] sm:$0xf]
    %v513 = vld [vmem:[%s15 + $0x18] sm:$0xf]
    %v514 = vld [vmem:[%s15 + $0x1c] sm:$0xf]
    %v515 = vld [vmem:[%s15 + $0x20] sm:$0xf]
    %v516 = vld [vmem:[%s15 + $0x24] sm:$0xf]
    %v517 = vld [vmem:[%s15 + $0x28] sm:$0xf]
    %v518 = vld [vmem:[%s15 + $0x2c] sm:$0xf]
    %v519 = vld [vmem:[%s15 + $0x30] sm:$0xf]
    %v520 = vld [vmem:[%s15 + $0x34] sm:$0xf]
    %v521 = vld [vmem:[%s15 + $0x38] sm:$0xf]
    %v522 = vld [vmem:[%s15 + $0x3c] sm:$0xf]
    %v523 = vld [vmem:[%s16] sm:$0x1]
    %v525 = vlaneseq
    %v526 = vshrl.u32 %v525, 7
    %v527 = vsub.s32 0, %v526
    %v528 = vrot.slane %v523, %v527
    %v546 = vunpack.c.l.b16 %v507
    %v547 = vunpack.c.l.b16 %v508
    %v548 = vunpack.c.l.b16 %v509
    %v549 = vunpack.c.l.b16 %v510
    %v550 = vunpack.c.l.b16 %v511
    %v551 = vunpack.c.l.b16 %v512
    %v552 = vunpack.c.l.b16 %v513
    %v553 = vunpack.c.l.b16 %v514
    %v554 = vunpack.c.l.b16 %v515
    %v555 = vunpack.c.l.b16 %v516
    %v556 = vunpack.c.l.b16 %v517
    %v557 = vunpack.c.l.b16 %v518
    %v558 = vunpack.c.l.b16 %v519
    %v559 = vunpack.c.l.b16 %v520
    %v560 = vunpack.c.l.b16 %v521
    %v561 = vunpack.c.l.b16 %v522
    %v562 = vpack.c.b16 %v547, %v546
    %v563 = vpack.c.b16 %v549, %v548
    %v564 = vpack.c.b16 %v551, %v550
    %v565 = vpack.c.b16 %v553, %v552
    %v566 = vpack.c.b16 %v555, %v554
    %v567 = vpack.c.b16 %v557, %v556
    %v568 = vpack.c.b16 %v559, %v558
    %v569 = vpack.c.b16 %v561, %v560
    %578 = vmatprep.subr.bf16.mxu0 0
    %579 = vmatpush1.bf16.msra.mxu0 %v569
    %580 = vmatprep.subr.bf16.mxu0 0
    %581 = vmatpush1.bf16.msra.mxu0 %v568
    %582 = vmatprep.subr.bf16.mxu0 0
    %583 = vmatpush1.bf16.msra.mxu0 %v567
    %584 = vmatprep.subr.bf16.mxu0 0
    %585 = vmatpush1.bf16.msra.mxu0 %v566
    %586 = vmatprep.subr.bf16.mxu0 0
    %587 = vmatpush1.bf16.msra.mxu0 %v565
    %588 = vmatprep.subr.bf16.mxu0 0
    %589 = vmatpush1.bf16.msra.mxu0 %v564
    %590 = vmatprep.subr.bf16.mxu0 0
    %591 = vmatpush1.bf16.msra.mxu0 %v563
    %592 = vmatprep.subr.bf16.mxu0 0
    %593 = vmatpush1.bf16.msra.mxu0 %v562
    %594 = vmatprep.subr.bf16.mxu0 0
    %595 = vmatpush2.bf16.msra.mxu0 0
    %596 = vmatprep.subr.bf16.mxu0 0
    %597 = vmatpush2.bf16.msra.mxu0 0
    %598 = vmatprep.subr.bf16.mxu0 0
    %599 = vmatpush2.bf16.msra.mxu0 0
    %600 = vmatprep.subr.bf16.mxu0 0
    %601 = vmatpush2.bf16.msra.mxu0 0
    %602 = vmatprep.subr.bf16.mxu0 0
    %603 = vmatpush2.bf16.msra.mxu0 0
    %604 = vmatprep.subr.bf16.mxu0 0
    %605 = vmatpush2.bf16.msra.mxu0 0
    %606 = vmatprep.subr.bf16.mxu0 0
    %607 = vmatpush2.bf16.msra.mxu0 0
    %608 = vmatprep.subr.bf16.mxu0 0
    %609 = vmatpush2.bf16.msra.mxu0 0
    %610 = vmatprep.mubr.bf16.mxu0 0
    %611 = vmatmul.mubr.bf16.gmra.mxu0 %v506
    %v612 = vpop.f32.mrf.mxu0
    %v613 = vadd.f32 %v528, %v612
    %v614 = vpop.f32.mrf.mxu0
    %v615 = vpop.f32.mrf.mxu0
    %v616 = vpop.f32.mrf.mxu0
    %617 = vdwg.mxu0
    %v618 = vld [vmem:[%s17] sm:$0x1]
    %v619 = vld [vmem:[%s18] sm:$0x1]
    %v620 = vsel %vm178, %v613, 0.0
    %621 = vadd.xlane.f32.xlu0 %v620
    %v622 = vpop.xlane.xlu0 %621
    %v623 = vmul.f32 %v622, %v368
    %v624 = vsub.f32 %v613, %v623
    %v625 = vmul.f32 %v624, %v624
    %v626 = vsel %vm178, %v625, 0.0
    %627 = vadd.xlane.f32.xlu0 %v626
    %v628 = vpop.xlane.xlu0 %627
    %v629 = vmul.f32 %v628, %v368
    %v630 = vadd.f32 %v629, 1e-05
    %v631 = vrsqrt.pop %v630
    %v632 = vmul.f32 %v624, %v631
    %v634 = vlaneseq
    %v635 = vshrl.u32 %v634, 7
    %v636 = vsub.s32 0, %v635
    %v637 = vrot.slane %v618, %v636
    %v639 = vmul.f32 %v632, %v637
    %v641 = vlaneseq
    %v642 = vshrl.u32 %v641, 7
    %v643 = vsub.s32 0, %v642
    %v644 = vrot.slane %v619, %v643
    %v646 = vadd.f32 %v639, %v644
    %v647 = vadd.f32 %v646, %v394
    %v648 = vmax.f32 %v647, 0.0
    %v649 = vpack.c.bf16 %v648, %v648
    %v650 = vld [vmem:[%s19] sm:$0xf]
    %v651 = vld [vmem:[%s19 + $0x4] sm:$0xf]
    %v652 = vld [vmem:[%s19 + $0x8] sm:$0xf]
    %v653 = vld [vmem:[%s19 + $0xc] sm:$0xf]
    %v654 = vld [vmem:[%s19 + $0x10] sm:$0xf]
    %v655 = vld [vmem:[%s19 + $0x14] sm:$0xf]
    %v656 = vld [vmem:[%s19 + $0x18] sm:$0xf]
    %v657 = vld [vmem:[%s19 + $0x1c] sm:$0xf]
    %v658 = vld [vmem:[%s20] sm:$0x1]
    %v660 = vlaneseq
    %v661 = vshrl.u32 %v660, 7
    %v662 = vsub.s32 0, %v661
    %v663 = vrot.slane %v658, %v662
    %v673 = vunpack.c.l.b16 %v650
    %v674 = vunpack.c.l.b16 %v651
    %v675 = vunpack.c.l.b16 %v652
    %v676 = vunpack.c.l.b16 %v653
    %v677 = vunpack.c.l.b16 %v654
    %v678 = vunpack.c.l.b16 %v655
    %v679 = vunpack.c.l.b16 %v656
    %v680 = vunpack.c.l.b16 %v657
    %v681 = vpack.c.b16 %v674, %v673
    %v682 = vpack.c.b16 %v676, %v675
    %v683 = vpack.c.b16 %v678, %v677
    %v684 = vpack.c.b16 %v680, %v679
    %v690 = vsel %vm178, %v649, 0
    %692 = vmatprep.subr.bf16.mxu0 0
    %693 = vmatpush1.bf16.msra.mxu0 0
    %694 = vmatprep.subr.bf16.mxu0 0
    %695 = vmatpush1.bf16.msra.mxu0 0
    %696 = vmatprep.subr.bf16.mxu0 0
    %697 = vmatpush1.bf16.msra.mxu0 0
    %698 = vmatprep.subr.bf16.mxu0 0
    %699 = vmatpush1.bf16.msra.mxu0 0
    %700 = vmatprep.subr.bf16.mxu0 0
    %701 = vmatpush1.bf16.msra.mxu0 %v684
    %702 = vmatprep.subr.bf16.mxu0 0
    %703 = vmatpush1.bf16.msra.mxu0 %v683
    %704 = vmatprep.subr.bf16.mxu0 0
    %705 = vmatpush1.bf16.msra.mxu0 %v682
    %706 = vmatprep.subr.bf16.mxu0 0
    %707 = vmatpush1.bf16.msra.mxu0 %v681
    %708 = vmatprep.subr.bf16.mxu0 0
    %709 = vmatpush2.bf16.msra.mxu0 0
    %710 = vmatprep.subr.bf16.mxu0 0
    %711 = vmatpush2.bf16.msra.mxu0 0
    %712 = vmatprep.subr.bf16.mxu0 0
    %713 = vmatpush2.bf16.msra.mxu0 0
    %714 = vmatprep.subr.bf16.mxu0 0
    %715 = vmatpush2.bf16.msra.mxu0 0
    %716 = vmatprep.subr.bf16.mxu0 0
    %717 = vmatpush2.bf16.msra.mxu0 0
    %718 = vmatprep.subr.bf16.mxu0 0
    %719 = vmatpush2.bf16.msra.mxu0 0
    %720 = vmatprep.subr.bf16.mxu0 0
    %721 = vmatpush2.bf16.msra.mxu0 0
    %722 = vmatprep.subr.bf16.mxu0 0
    %723 = vmatpush2.bf16.msra.mxu0 0
    %724 = vmatprep.mubr.bf16.mxu0 0
    %725 = vmatmul.mubr.bf16.gmra.mxu0 %v690
    %v726 = vpop.f32.mrf.mxu0
    %v727 = vadd.f32 %v663, %v726
    %v728 = vpop.f32.mrf.mxu0
    %v729 = vpop.f32.mrf.mxu0
    %v730 = vpop.f32.mrf.mxu0
    %731 = vdwg.mxu0
    %732 = vst [vmem:[#allocation2] sm:$0xff] %v727
    // Predicated region
    $region86: #{tpu_custom_call.1} parent=1 // pred_check
      _
    $region87: #{tpu_custom_call.1} parent=1 // pred_check_branch
      %734 = sbr.rel (0) target = $region89
    $region88: #{tpu_custom_call.1} parent=1 // pred_region
      %s736 = ssub.s32 128, 128
      %737 = vsyncadd [#allocation3], %s736
      %s739 = sshll.u32 [#allocation2], 4
      %s740 = int_to_ptr.vmem [resolvable:$true] %s739
      %742 = dma.vmem_to_hbm [thread:$0]  %s740, 128, %s21, [#allocation3]
    $region89: #{tpu_custom_call.1} parent=1 // pred_fallthru
      _
    // Predicated region
    $region90: #{tpu_custom_call.1} parent=1 // pred_check
      _
    $region91: #{tpu_custom_call.1} parent=1 // pred_check_branch
      %744 = sbr.rel (0) target = $region93
    $region92: #{tpu_custom_call.1} parent=1 // pred_region
      %745 = dma.done [#allocation3], 128
    $region93: #{tpu_custom_call.1} parent=1 // pred_fallthru
      _
    %746 = vsyncpa [#allocation3], 1

</llo_original>
